<compile_context>
chip_gen: v7x
topology: tpu7x:2x2x1
jax: 0.10.0
libtpu: 0.0.40
codegen_flags: <defaults>
</compile_context>

<pallas_src>
import functools
import math

import jax
import jax.numpy as jnp
from jax.experimental import pallas as pl
from jax.experimental.pallas import tpu as pltpu


# -----------------------------------------------------------------------------
# Generation-dependent VMEM budget / tiling
# -----------------------------------------------------------------------------
@functools.lru_cache(maxsize=1)
def _vmem_cfg():
    """(vmem_limit_bytes, sequence-tile candidates) for the local TPU."""
    mib = 1024 * 1024
    try:
        cap = int(getattr(pltpu.get_tpu_info(), "vmem_capacity_bytes", 0)) or 64 * mib
    except Exception:
        cap = 64 * mib                       # conservative fallback
    limit = min(max(cap - 12 * mib, 32 * mib), 112 * mib)
    # Bigger query tiles on 128 MiB parts (v5e/v6e), smaller on 64 MiB v7x.
    seq_tiles = (512, 256, 128) if cap >= 96 * mib else (256, 128)
    return limit, seq_tiles


def _pick_tile(n, candidates):
    """Largest candidate that divides n, else the full extent."""
    for c in candidates:
        if n % c == 0:
            return c
    return n


def _round_up(x, m):
    return ((x + m - 1) // m) * m


def _layernorm(h, g, b, eps=1e-5):
    mean = jnp.mean(h, axis=-1, keepdims=True)
    var = jnp.mean((h - mean) ** 2, axis=-1, keepdims=True)    # unbiased=False
    return (h - mean) / jnp.sqrt(var + eps) * g + b


# -----------------------------------------------------------------------------
# Kernel 1: pre-LN + QKV projections (once per layer, not once per query tile)
# -----------------------------------------------------------------------------
def qkv_proj_kernel(x_ref, g_ref, b_ref, wq_ref, wk_ref, wv_ref,
                    q_ref, k_ref, v_ref, *, num_heads):
    ts, E = x_ref.shape[1], x_ref.shape[2]
    H = num_heads
    hd = E // H
    h = _layernorm(x_ref[0], g_ref[...], b_ref[...]).astype(jnp.bfloat16)
    scale = 1.0 / math.sqrt(hd)
    q = jnp.dot(h, wq_ref[...], preferred_element_type=jnp.float32) * scale
    k = jnp.dot(h, wk_ref[...], preferred_element_type=jnp.float32)
    v = jnp.dot(h, wv_ref[...], preferred_element_type=jnp.float32)
    # Store head-major (H, ts, hd) so the attention kernel needs no transposes.
    q_ref[0] = jnp.swapaxes(q.astype(jnp.bfloat16).reshape(ts, H, hd), 0, 1)
    k_ref[0] = jnp.swapaxes(k.astype(jnp.bfloat16).reshape(ts, H, hd), 0, 1)
    v_ref[0] = jnp.swapaxes(v.astype(jnp.bfloat16).reshape(ts, H, hd), 0, 1)


def run_qkv_proj(x, p, num_heads):
    B, S, E = x.shape
    H = num_heads
    hd = E // H
    vmem_limit, seq_tiles = _vmem_cfg()
    ts = _pick_tile(S, seq_tiles)
    weights = [p['ln1_g'], p['ln1_b'], p['wq'], p['wk'], p['wv']]
    head_spec = pl.BlockSpec((1, H, ts, hd), lambda b, si: (b, 0, si, 0))
    out_sd = jax.ShapeDtypeStruct((B, H, S, hd), jnp.bfloat16)
    kernel = functools.partial(qkv_proj_kernel, num_heads=H)
    return pl.pallas_call(
        kernel,
        out_shape=(out_sd, out_sd, out_sd),
        grid=(B, S // ts),
        in_specs=[pl.BlockSpec((1, ts, E), lambda b, si: (b, si, 0))]
                 + [pl.BlockSpec(w.shape, lambda b, si: (0, 0)) for w in weights],
        out_specs=(head_spec, head_spec, head_spec),
        compiler_params=pltpu.CompilerParams(
            dimension_semantics=("parallel", "parallel"),
            vmem_limit_bytes=vmem_limit),
    )(x, *weights)


# -----------------------------------------------------------------------------
# Kernel 2: flash-style causal attention + output proj + FFN (fused, row-local)
# -----------------------------------------------------------------------------
def attn_ffn_kernel(x_ref, q_ref, k_ref, v_ref,
                    wo_ref, bo_ref, ln2_g_ref, ln2_b_ref,
                    w1_ref, b1_ref, w2_ref, b2_ref,
                    out_ref,
                    m_ref, l_ref, acc_ref,
                    *, num_heads, tile_q):
    H = num_heads
    hd = k_ref.shape[3]
    E = H * hd
    tile_k = tile_q
    qi = pl.program_id(1)
    q0 = qi * tile_q

    x_tile = x_ref[0]                                   # (TQ, E) f32
    qh = q_ref[0]                                       # (H, TQ, hd) bf16

    m_ref[...] = jnp.full(m_ref.shape, -1e30, jnp.float32)
    l_ref[...] = jnp.zeros(l_ref.shape, jnp.float32)
    acc_ref[...] = jnp.zeros(acc_ref.shape, jnp.float32)

    def kv_step(kv, carry):
        k0 = pl.multiple_of(kv * tile_k, tile_k)
        kt = k_ref[0, :, pl.ds(k0, tile_k), :]          # (H, TK, hd) bf16
        vt = v_ref[0, :, pl.ds(k0, tile_k), :]          # (H, TK, hd) bf16
        s = jnp.einsum('hqd,hkd->hqk', qh, kt,
                       preferred_element_type=jnp.float32)   # (H, TQ, TK)
        row = jax.lax.broadcasted_iota(jnp.int32, (tile_q, tile_k), 0) + q0
        col = jax.lax.broadcasted_iota(jnp.int32, (tile_q, tile_k), 1) + k0
        s = jnp.where((row >= col)[None, :, :], s, -1e30)

        m_prev = m_ref[...]
        m_new = jnp.maximum(m_prev, jnp.max(s, axis=-1, keepdims=True))
        alpha = jnp.exp(m_prev - m_new)
        p = jnp.exp(s - m_new)
        l_ref[...] = alpha * l_ref[...] + jnp.sum(p, axis=-1, keepdims=True)
        acc_ref[...] = alpha * acc_ref[...] + jnp.einsum(
            'hqk,hkd->hqd', p.astype(jnp.bfloat16), vt,
            preferred_element_type=jnp.float32)
        m_ref[...] = m_new
        return carry

    # Online softmax over KV tiles; tiles above the causal diagonal are skipped.
    jax.lax.fori_loop(0, qi + 1, kv_step, 0)

    ctx = acc_ref[...] * (1.0 / l_ref[...])             # exact normalization
    ctx = jnp.swapaxes(ctx, 0, 1).reshape(tile_q, E)    # one (TQ,E) relayout/tile
    att = jnp.dot(ctx.astype(jnp.bfloat16), wo_ref[...],
                  preferred_element_type=jnp.float32) + bo_ref[...]
    x_res = x_tile + att                                # residual (dropout = identity)

    # ---- feed-forward (pre-LN, tanh GELU), fori_loop over 4E hidden chunks ----
    h2 = _layernorm(x_res, ln2_g_ref[...], ln2_b_ref[...]).astype(jnp.bfloat16)
    HID = w1_ref.shape[1]
    chunk = 512 if (HID > 512 and HID % 512 == 0) else HID
    n_chunks = HID // chunk

    def ffn_chunk(w1c, b1c, w2c):
        f = jnp.dot(h2, w1c, preferred_element_type=jnp.float32) + b1c
        f = jax.nn.gelu(f, approximate=True)            # tanh GELU (EUP)
        return jnp.dot(f.astype(jnp.bfloat16), w2c,
                       preferred_element_type=jnp.float32)

    if n_chunks == 1:
        y = ffn_chunk(w1_ref[...], b1_ref[...], w2_ref[...])
    else:
        def ffn_step(c, y):
            c0 = pl.multiple_of(c * chunk, chunk)
            return y + ffn_chunk(w1_ref[:, pl.ds(c0, chunk)],
                                 b1_ref[:, pl.ds(c0, chunk)],
                                 w2_ref[pl.ds(c0, chunk), :])
        y = jax.lax.fori_loop(0, n_chunks, ffn_step,
                              jnp.zeros((tile_q, E), jnp.float32))

    out_ref[0] = x_res + y + b2_ref[...]                # residual (dropout = identity)


def run_attn_ffn(x, q, k, v, p, num_heads):
    B, S, E = x.shape
    H = num_heads
    hd = E // H
    vmem_limit, seq_tiles = _vmem_cfg()
    tq = _pick_tile(S, seq_tiles)
    weights = [p['wo'], p['bo'], p['ln2_g'], p['ln2_b'],
               p['w1'], p['b1'], p['w2'], p['b2']]
    kernel = functools.partial(attn_ffn_kernel, num_heads=H, tile_q=tq)
    return pl.pallas_call(
        kernel,
        out_shape=jax.ShapeDtypeStruct((B, S, E), jnp.float32),
        grid=(B, S // tq),
        in_specs=[pl.BlockSpec((1, tq, E), lambda b, qi: (b, qi, 0)),
                  pl.BlockSpec((1, H, tq, hd), lambda b, qi: (b, 0, qi, 0)),
                  pl.BlockSpec((1, H, S, hd), lambda b, qi: (b, 0, 0, 0)),
                  pl.BlockSpec((1, H, S, hd), lambda b, qi: (b, 0, 0, 0))]
                 + [pl.BlockSpec(w.shape, lambda b, qi: (0, 0)) for w in weights],
        out_specs=pl.BlockSpec((1, tq, E), lambda b, qi: (b, qi, 0)),
        scratch_shapes=[pltpu.VMEM((H, tq, 1), jnp.float32),
                        pltpu.VMEM((H, tq, 1), jnp.float32),
                        pltpu.VMEM((H, tq, hd), jnp.float32)],
        compiler_params=pltpu.CompilerParams(
            dimension_semantics=("parallel", "parallel"),
            vmem_limit_bytes=vmem_limit),
    )(x, q, k, v, *weights)


# -----------------------------------------------------------------------------
# Kernel 3: final LayerNorm (computed once, not once per vocab tile)
# -----------------------------------------------------------------------------
def final_ln_kernel(x_ref, g_ref, b_ref, out_ref):
    out_ref[0] = _layernorm(x_ref[0], g_ref[...], b_ref[...]).astype(jnp.bfloat16)


def run_final_ln(x, p):
    B, S, E = x.shape
    vmem_limit, seq_tiles = _vmem_cfg()
    ts = _pick_tile(S, seq_tiles)
    return pl.pallas_call(
        final_ln_kernel,
        out_shape=jax.ShapeDtypeStruct((B, S, E), jnp.bfloat16),
        grid=(B, S // ts),
        in_specs=[pl.BlockSpec((1, ts, E), lambda b, si: (b, si, 0)),
                  pl.BlockSpec(p['fn_g'].shape, lambda b, si: (0, 0)),
                  pl.BlockSpec(p['fn_b'].shape, lambda b, si: (0, 0))],
        out_specs=pl.BlockSpec((1, ts, E), lambda b, si: (b, si, 0)),
        compiler_params=pltpu.CompilerParams(
            dimension_semantics=("parallel", "parallel"),
            vmem_limit_bytes=vmem_limit),
    )(x, p['fn_g'], p['fn_b'])


# -----------------------------------------------------------------------------
# Kernel 4: output head, tiled over sequence and (padded) vocab
# -----------------------------------------------------------------------------
def head_kernel(h_ref, w_ref, out_ref):
    out_ref[0] = jnp.dot(h_ref[0], w_ref[...], preferred_element_type=jnp.float32)


def run_head(h, p, vocab_size):
    B, S, E = h.shape
    w = p['w_out']                                       # (E, V) bf16
    V = w.shape[1]
    vmem_limit, _ = _vmem_cfg()
    # Lane-dense vocab tile; pad vocab (e.g. GPT-2's 50257) to a tile multiple.
    tv = 2048 if V >= 2048 else _round_up(V, 128)
    vp = _round_up(V, tv)
    if vp != V:
        w = jnp.pad(w, ((0, 0), (0, vp - V)))
    ts = _pick_tile(S, (256, 128))
    logits = pl.pallas_call(
        head_kernel,
        out_shape=jax.ShapeDtypeStruct((B, S, vp), jnp.float32),
        grid=(B, S // ts, vp // tv),
        in_specs=[pl.BlockSpec((1, ts, E), lambda b, si, vj: (b, si, 0)),
                  pl.BlockSpec((E, tv), lambda b, si, vj: (0, vj))],
        out_specs=pl.BlockSpec((1, ts, tv), lambda b, si, vj: (b, si, vj)),
        compiler_params=pltpu.CompilerParams(
            dimension_semantics=("parallel", "parallel", "parallel"),
            vmem_limit_bytes=vmem_limit),
    )(h, w)
    return logits[..., :vocab_size] if vp != vocab_size else logits


# -----------------------------------------------------------------------------
# Parameter init + full forward
# -----------------------------------------------------------------------------
def init_params(key, cfg):
    V, E, C = cfg['vocab_size'], cfg['emb_dim'], cfg['context_length']
    L = cfg['n_layers']
    std = 0.02

    def nxt():
        nonlocal key
        key, sub = jax.random.split(key)
        return sub

    def w_bf16(shape):
        # Matmul weights stored in bf16 (MXU operands, half the HBM traffic).
        return (jax.random.normal(nxt(), shape, jnp.float32) * std).astype(jnp.bfloat16)

    params = {
        'tok_emb': jax.random.normal(nxt(), (V, E), jnp.float32) * std,
        'pos_emb': jax.random.normal(nxt(), (C, E), jnp.float32) * std,
        'fn_g': jnp.ones((1, E), jnp.float32),
        'fn_b': jnp.zeros((1, E), jnp.float32),
        'w_out': w_bf16((E, V)),
        'blocks': [],
    }
    for _ in range(L):
        params['blocks'].append({
            'ln1_g': jnp.ones((1, E), jnp.float32),
            'ln1_b': jnp.zeros((1, E), jnp.float32),
            'wq': w_bf16((E, E)),
            'wk': w_bf16((E, E)),
            'wv': w_bf16((E, E)),
            'wo': w_bf16((E, E)),
            'bo': jnp.zeros((1, E), jnp.float32),
            'ln2_g': jnp.ones((1, E), jnp.float32),
            'ln2_b': jnp.zeros((1, E), jnp.float32),
            'w1': w_bf16((E, 4 * E)),
            'b1': jnp.zeros((1, 4 * E), jnp.float32),
            'w2': w_bf16((4 * E, E)),
            'b2': jnp.zeros((1, E), jnp.float32),
        })
    return params


def gpt_forward(params, token_ids, cfg):
    B, S = token_ids.shape
    # Embedding gathers are glue (plain JAX); hot path runs in Pallas kernels.
    tok = params['tok_emb'][token_ids]                    # (B, S, E)
    pos = params['pos_emb'][jnp.arange(S)]                # (S, E)
    x = tok + pos[None, :, :]
    # dropout(drop_rate) in eval mode -> identity
    for blk in params['blocks']:
        q, k, v = run_qkv_proj(x, blk, cfg['n_heads'])    # K/V computed once
        x = run_attn_ffn(x, q, k, v, blk, cfg['n_heads'])
    h = run_final_ln(x, params)
    return run_head(h, params, cfg['vocab_size'])         # (B, S, vocab)


# -----------------------------------------------------------------------------
# Main
# -----------------------------------------------------------------------------
if __name__ == "__main__":
    cfg = {
        'vocab_size': 64,
        'context_length': 16,
        'emb_dim': 32,
        'n_heads': 4,
        'n_layers': 2,
        'drop_rate': 0.0,
        'qkv_bias': False,
    }
    B, S = 2, 8

    key = jax.random.PRNGKey(0)
    k_param, k_tok = jax.random.split(key)
    params = init_params(k_param, cfg)
    token_ids = jax.random.randint(k_tok, (B, S), 0, cfg['vocab_size'], dtype=jnp.int32)

    logits = gpt_forward(params, token_ids, cfg)
    logits = jax.block_until_ready(logits)

    assert logits.shape == (B, S, cfg['vocab_size']), logits.shape
    assert bool(jnp.all(jnp.isfinite(logits)))
    print("KERNEL_OK")
</pallas_src>

<mosaic_0001>
module attributes {stable_mosaic.version = 11 : i64} {
  func.func @qkv_proj_kernel(%arg0: i32, %arg1: i32, %arg2: memref<1x8x32xf32, #tpu.memory_space<vmem>>, %arg3: memref<1x32xf32, #tpu.memory_space<vmem>>, %arg4: memref<1x32xf32, #tpu.memory_space<vmem>>, %arg5: memref<32x32xbf16, #tpu.memory_space<vmem>>, %arg6: memref<32x32xbf16, #tpu.memory_space<vmem>>, %arg7: memref<32x32xbf16, #tpu.memory_space<vmem>>, %arg8: memref<1x4x8x8xbf16, #tpu.memory_space<vmem>>, %arg9: memref<1x4x8x8xbf16, #tpu.memory_space<vmem>>, %arg10: memref<1x4x8x8xbf16, #tpu.memory_space<vmem>>) attributes {dimension_semantics = [#tpu.dimension_semantics<parallel>, #tpu.dimension_semantics<parallel>], iteration_bounds = array<i64: 2, 1>, scalar_prefetch = 0 : i64, scratch_operands = 0 : i64, tpu.core_type = #tpu.core_type<tc>, window_params = [{transform_indices = @transform_0, window_bounds = array<i64: 1, 8, 32>}, {pipeline_mode = #tpu.pipeline_mode<synchronous>, transform_indices = @transform_1, window_bounds = array<i64: 1, 32>}, {pipeline_mode = #tpu.pipeline_mode<synchronous>, transform_indices = @transform_2, window_bounds = array<i64: 1, 32>}, {pipeline_mode = #tpu.pipeline_mode<synchronous>, transform_indices = @transform_3, window_bounds = array<i64: 32, 32>}, {pipeline_mode = #tpu.pipeline_mode<synchronous>, transform_indices = @transform_4, window_bounds = array<i64: 32, 32>}, {pipeline_mode = #tpu.pipeline_mode<synchronous>, transform_indices = @transform_5, window_bounds = array<i64: 32, 32>}, {transform_indices = @transform_6, window_bounds = array<i64: 1, 4, 8, 8>}, {transform_indices = @transform_7, window_bounds = array<i64: 1, 4, 8, 8>}, {transform_indices = @transform_8, window_bounds = array<i64: 1, 4, 8, 8>}]} {
    %c0 = arith.constant 0 : index
    %c0_0 = arith.constant 0 : index
    %c0_1 = arith.constant 0 : index
    %0 = vector.load %arg2[%c0, %c0_0, %c0_1] : memref<1x8x32xf32, #tpu.memory_space<vmem>>, vector<1x8x32xf32>
    %1 = vector.shape_cast %0 : vector<1x8x32xf32> to vector<8x32xf32>
    %c0_2 = arith.constant 0 : index
    %c0_3 = arith.constant 0 : index
    %2 = vector.load %arg3[%c0_2, %c0_3] : memref<1x32xf32, #tpu.memory_space<vmem>>, vector<1x32xf32>
    %c0_4 = arith.constant 0 : index
    %c0_5 = arith.constant 0 : index
    %3 = vector.load %arg4[%c0_4, %c0_5] : memref<1x32xf32, #tpu.memory_space<vmem>>, vector<1x32xf32>
    %cst = arith.constant dense<0.000000e+00> : vector<8xf32>
    %4 = vector.multi_reduction <add>, %1, %cst [1] : vector<8x32xf32> to vector<8xf32>
    %5 = vector.shape_cast %4 : vector<8xf32> to vector<8x1xf32>
    %cst_6 = arith.constant 3.200000e+01 : f32
    %6 = vector.broadcast %cst_6 : f32 to vector<8x1xf32>
    %7 = arith.divf %5, %6 : vector<8x1xf32>
    %8 = vector.broadcast %7 : vector<8x1xf32> to vector<8x32xf32>
    %9 = arith.subf %1, %8 : vector<8x32xf32>
    %10 = arith.mulf %9, %9 : vector<8x32xf32>
    %cst_7 = arith.constant dense<0.000000e+00> : vector<8xf32>
    %11 = vector.multi_reduction <add>, %10, %cst_7 [1] : vector<8x32xf32> to vector<8xf32>
    %12 = vector.shape_cast %11 : vector<8xf32> to vector<8x1xf32>
    %cst_8 = arith.constant 3.200000e+01 : f32
    %13 = vector.broadcast %cst_8 : f32 to vector<8x1xf32>
    %14 = arith.divf %12, %13 : vector<8x1xf32>
    %15 = vector.broadcast %7 : vector<8x1xf32> to vector<8x32xf32>
    %16 = arith.subf %1, %15 : vector<8x32xf32>
    %cst_9 = arith.constant 9.99999974E-6 : f32
    %17 = vector.broadcast %cst_9 : f32 to vector<8x1xf32>
    %18 = arith.addf %14, %17 : vector<8x1xf32>
    %19 = math.sqrt %18 : vector<8x1xf32>
    %20 = vector.broadcast %19 : vector<8x1xf32> to vector<8x32xf32>
    %21 = arith.divf %16, %20 : vector<8x32xf32>
    %22 = vector.broadcast %2 : vector<1x32xf32> to vector<8x32xf32>
    %23 = arith.mulf %21, %22 : vector<8x32xf32>
    %24 = vector.broadcast %3 : vector<1x32xf32> to vector<8x32xf32>
    %25 = arith.addf %23, %24 : vector<8x32xf32>
    %26 = arith.truncf %25 : vector<8x32xf32> to vector<8x32xbf16>
    %c0_10 = arith.constant 0 : index
    %c0_11 = arith.constant 0 : index
    %27 = vector.load %arg5[%c0_10, %c0_11] : memref<32x32xbf16, #tpu.memory_space<vmem>>, vector<32x32xbf16>
    %cst_12 = arith.constant dense<0.000000e+00> : vector<8x32xf32>
    %28 = tpu.matmul %26, %27, %cst_12 {dimension_numbers = #tpu.dot_dimension_numbers<[1], [0], [0], [1], [0, 0, 1, 1], [], []>} : vector<8x32xbf16>, vector<32x32xbf16>, vector<8x32xf32> -> vector<8x32xf32>
    %cst_13 = arith.constant 0.353553385 : f32
    %29 = vector.broadcast %cst_13 : f32 to vector<8x32xf32>
    %30 = arith.mulf %28, %29 : vector<8x32xf32>
    %c0_14 = arith.constant 0 : index
    %c0_15 = arith.constant 0 : index
    %31 = vector.load %arg6[%c0_14, %c0_15] : memref<32x32xbf16, #tpu.memory_space<vmem>>, vector<32x32xbf16>
    %cst_16 = arith.constant dense<0.000000e+00> : vector<8x32xf32>
    %32 = tpu.matmul %26, %31, %cst_16 {dimension_numbers = #tpu.dot_dimension_numbers<[1], [0], [0], [1], [0, 0, 1, 1], [], []>} : vector<8x32xbf16>, vector<32x32xbf16>, vector<8x32xf32> -> vector<8x32xf32>
    %c0_17 = arith.constant 0 : index
    %c0_18 = arith.constant 0 : index
    %33 = vector.load %arg7[%c0_17, %c0_18] : memref<32x32xbf16, #tpu.memory_space<vmem>>, vector<32x32xbf16>
    %cst_19 = arith.constant dense<0.000000e+00> : vector<8x32xf32>
    %34 = tpu.matmul %26, %33, %cst_19 {dimension_numbers = #tpu.dot_dimension_numbers<[1], [0], [0], [1], [0, 0, 1, 1], [], []>} : vector<8x32xbf16>, vector<32x32xbf16>, vector<8x32xf32> -> vector<8x32xf32>
    %35 = arith.truncf %30 : vector<8x32xf32> to vector<8x32xbf16>
    %36 = vector.shape_cast %35 : vector<8x32xbf16> to vector<8x4x8xbf16>
    %37 = tpu.transpose %36, [1, 0, 2] : vector<8x4x8xbf16> -> vector<4x8x8xbf16>
    %c0_20 = arith.constant 0 : index
    %c0_21 = arith.constant 0 : index
    %c0_22 = arith.constant 0 : index
    %c0_23 = arith.constant 0 : index
    %38 = vector.load %arg8[%c0_20, %c0_21, %c0_22, %c0_23] : memref<1x4x8x8xbf16, #tpu.memory_space<vmem>>, vector<1x4x8x8xbf16>
    %39 = vector.shape_cast %38 : vector<1x4x8x8xbf16> to vector<4x8x8xbf16>
    %40 = vector.shape_cast %37 : vector<4x8x8xbf16> to vector<1x4x8x8xbf16>
    tpu.vector_store %arg8[%c0_20, %c0_21, %c0_22, %c0_23], %40 {strides = array<i32>} : memref<1x4x8x8xbf16, #tpu.memory_space<vmem>>, vector<1x4x8x8xbf16>,
    %41 = arith.truncf %32 : vector<8x32xf32> to vector<8x32xbf16>
    %42 = vector.shape_cast %41 : vector<8x32xbf16> to vector<8x4x8xbf16>
    %43 = tpu.transpose %42, [1, 0, 2] : vector<8x4x8xbf16> -> vector<4x8x8xbf16>
    %c0_24 = arith.constant 0 : index
    %c0_25 = arith.constant 0 : index
    %c0_26 = arith.constant 0 : index
    %c0_27 = arith.constant 0 : index
    %44 = vector.load %arg9[%c0_24, %c0_25, %c0_26, %c0_27] : memref<1x4x8x8xbf16, #tpu.memory_space<vmem>>, vector<1x4x8x8xbf16>
    %45 = vector.shape_cast %44 : vector<1x4x8x8xbf16> to vector<4x8x8xbf16>
    %46 = vector.shape_cast %43 : vector<4x8x8xbf16> to vector<1x4x8x8xbf16>
    tpu.vector_store %arg9[%c0_24, %c0_25, %c0_26, %c0_27], %46 {strides = array<i32>} : memref<1x4x8x8xbf16, #tpu.memory_space<vmem>>, vector<1x4x8x8xbf16>,
    %47 = arith.truncf %34 : vector<8x32xf32> to vector<8x32xbf16>
    %48 = vector.shape_cast %47 : vector<8x32xbf16> to vector<8x4x8xbf16>
    %49 = tpu.transpose %48, [1, 0, 2] : vector<8x4x8xbf16> -> vector<4x8x8xbf16>
    %c0_28 = arith.constant 0 : index
    %c0_29 = arith.constant 0 : index
    %c0_30 = arith.constant 0 : index
    %c0_31 = arith.constant 0 : index
    %50 = vector.load %arg10[%c0_28, %c0_29, %c0_30, %c0_31] : memref<1x4x8x8xbf16, #tpu.memory_space<vmem>>, vector<1x4x8x8xbf16>
    %51 = vector.shape_cast %50 : vector<1x4x8x8xbf16> to vector<4x8x8xbf16>
    %52 = vector.shape_cast %49 : vector<4x8x8xbf16> to vector<1x4x8x8xbf16>
    tpu.vector_store %arg10[%c0_28, %c0_29, %c0_30, %c0_31], %52 {strides = array<i32>} : memref<1x4x8x8xbf16, #tpu.memory_space<vmem>>, vector<1x4x8x8xbf16>,
    return
  }
  func.func @transform_0(%arg0: i32, %arg1: i32) -> (i32, i32, i32) {
    %c0_i32 = arith.constant 0 : i32
    %c0_i32_0 = arith.constant 0 : i32
    return %arg0, %arg1, %c0_i32 : i32, i32, i32
  }
  func.func @transform_1(%arg0: i32, %arg1: i32) -> (i32, i32) {
    %c0_i32 = arith.constant 0 : i32
    %c0_i32_0 = arith.constant 0 : i32
    %c0_i32_1 = arith.constant 0 : i32
    return %c0_i32, %c0_i32_0 : i32, i32
  }
  func.func @transform_2(%arg0: i32, %arg1: i32) -> (i32, i32) {
    %c0_i32 = arith.constant 0 : i32
    %c0_i32_0 = arith.constant 0 : i32
    %c0_i32_1 = arith.constant 0 : i32
    return %c0_i32, %c0_i32_0 : i32, i32
  }
  func.func @transform_3(%arg0: i32, %arg1: i32) -> (i32, i32) {
    %c0_i32 = arith.constant 0 : i32
    %c0_i32_0 = arith.constant 0 : i32
    %c0_i32_1 = arith.constant 0 : i32
    return %c0_i32, %c0_i32_0 : i32, i32
  }
  func.func @transform_4(%arg0: i32, %arg1: i32) -> (i32, i32) {
    %c0_i32 = arith.constant 0 : i32
    %c0_i32_0 = arith.constant 0 : i32
    %c0_i32_1 = arith.constant 0 : i32
    return %c0_i32, %c0_i32_0 : i32, i32
  }
  func.func @transform_5(%arg0: i32, %arg1: i32) -> (i32, i32) {
    %c0_i32 = arith.constant 0 : i32
    %c0_i32_0 = arith.constant 0 : i32
    %c0_i32_1 = arith.constant 0 : i32
    return %c0_i32, %c0_i32_0 : i32, i32
  }
  func.func @transform_6(%arg0: i32, %arg1: i32) -> (i32, i32, i32, i32) {
    %c0_i32 = arith.constant 0 : i32
    %c0_i32_0 = arith.constant 0 : i32
    %c0_i32_1 = arith.constant 0 : i32
    return %arg0, %c0_i32, %arg1, %c0_i32_0 : i32, i32, i32, i32
  }
  func.func @transform_7(%arg0: i32, %arg1: i32) -> (i32, i32, i32, i32) {
    %c0_i32 = arith.constant 0 : i32
    %c0_i32_0 = arith.constant 0 : i32
    %c0_i32_1 = arith.constant 0 : i32
    return %arg0, %c0_i32, %arg1, %c0_i32_0 : i32, i32, i32, i32
  }
  func.func @transform_8(%arg0: i32, %arg1: i32) -> (i32, i32, i32, i32) {
    %c0_i32 = arith.constant 0 : i32
    %c0_i32_0 = arith.constant 0 : i32
    %c0_i32_1 = arith.constant 0 : i32
    return %arg0, %c0_i32, %arg1, %c0_i32_0 : i32, i32, i32, i32
  }
}

</mosaic_0001>

<llo_original>
// kernel: tpu_custom_call.1
$region0: #{tpu_custom_call.1}
  #allocation0 [shape = 'u32[]', space=smem, size = 0x4, offset = 0x4, fixed_abs, tag = 'smem constant byte address 0x4 - core index']
  #allocation1 [shape = 'u32[144,128]{1,0:T(1,128)}', space=vmem, size = 0x12000, scoped, tag = 'internal scratch']
  %s0 = inlined_call_operand.hbm [shape: f32[2,8,32], index: 0, kind: input, shape index: {}]
  %s1 = inlined_call_operand.vmem [shape: f32[1,32], index: 1, kind: input, shape index: {}]
  %s2 = inlined_call_operand.vmem [shape: f32[1,32], index: 2, kind: input, shape index: {}]
  %s3 = inlined_call_operand.hbm [shape: bf16[32,32], index: 3, kind: input, shape index: {}]
  %s4 = inlined_call_operand.hbm [shape: bf16[32,32], index: 4, kind: input, shape index: {}]
  %s5 = inlined_call_operand.vmem [shape: bf16[32,32], index: 5, kind: input, shape index: {}]
  %s6 = inlined_call_operand.hbm [shape: bf16[2,4,8,8], index: 6, kind: output, shape index: {0}]
  %s7 = inlined_call_operand.hbm [shape: bf16[2,4,8,8], index: 7, kind: output, shape index: {1}]
  %s8 = inlined_call_operand.hbm [shape: bf16[2,4,8,8], index: 8, kind: output, shape index: {2}]
  %9 = xla_tuple %s6, %s7, %s8
  %s10 = sld [smem:[#allocation0]]
  $region85: #{tpu_custom_call.1} parent=0
    _
  %s12 = ssub.s32 1, %s10
  %s13 = scalar_select 0, %s12, %s10
  $region1: #{tpu_custom_call.1} parent=0
    #allocation2 [shape = 'u8[8192]{0}', space=vmem, size = 0x2000, scoped, tag = 'input window, operand 0']
    #allocation3 [shape = 's32[2]{0}', space=sflag, size = 0x8, scoped, tag = 'scoped memory for tpu_custom_call.1']
    #allocation4 [shape = 's32[2]{0}', space=sflag, size = 0x8, scoped, tag = 'scoped memory for tpu_custom_call.1']
    #allocation5 [shape = 'u8[8192]{0}', space=vmem, size = 0x2000, scoped, tag = 'input window, operand 3, single buffered']
    #allocation6 [shape = 's32[1]{0}', space=sflag, size = 0x4, scoped, tag = 'scoped memory for tpu_custom_call.1']
    #allocation7 [shape = 'u8[8192]{0}', space=vmem, size = 0x2000, scoped, tag = 'input window, operand 4, single buffered']
    #allocation8 [shape = 'u8[16384]{0}', space=vmem, size = 0x4000, scoped, tag = 'output window, operand 0']
    #allocation9 [shape = 'u8[16384]{0}', space=vmem, size = 0x4000, scoped, tag = 'output window, operand 1']
    #allocation10 [shape = 's32[2]{0}', space=sflag, size = 0x8, scoped, tag = 'scoped memory for tpu_custom_call.1']
    #allocation11 [shape = 'u8[16384]{0}', space=vmem, size = 0x4000, scoped, tag = 'output window, operand 2']
    %14 = vsyncpa [#allocation3], 0
    %s15 = scalar_lea.sflag [#allocation3], 1
    %16 = vsyncpa %s15, 0
    %17 = vsyncpa [#allocation6], 0
    %18 = vsyncpa [#allocation4], 0
    %s19 = scalar_lea.sflag [#allocation4], 1
    %20 = vsyncpa %s19, 0
    %21 = vsyncpa [#allocation10], 0
    %s22 = scalar_lea.sflag [#allocation10], 1
    %23 = vsyncpa %s22, 0
    loop: start=0, step=1, limit=4
    $region2: #{tpu_custom_call.1} parent=1 // loop_pre_header
      _
    $region3: #{tpu_custom_call.1} parent=1 // loop_header
      %s25 = sphi 0, %s29
      %p26 = scmp.ge.s32.totalorder %s25, 4
      %s32 = sphi 0, %s44
      %s33 = sphi 0, %s40
      %s34 = sphi 0, %s32
      %s35 = sphi 0, %s33
      %s36 = sphi 0, %s34
      %s37 = sphi 0, %s35
      %s49 = sphi 0, %s51
      %s52 = sphi 0, %s49
      %s53 = sphi 0, %s52
      %s69 = sphi 0, %s53
      %s73 = sphi 0, %s73
      %s75 = sphi 0, %s73
      %s76 = sphi 0, %s75
      %s90 = sphi 0, %s76
      %s94 = sphi 0, %s94
      %s96 = sphi 0, %s94
      %s97 = sphi 0, %s96
      %s111 = sphi 0, %s97
      %s115 = sphi 0, %s115
      %s117 = sphi 0, %s115
      %s118 = sphi 0, %s117
      %s132 = sphi 0, %s118
      %s136 = sphi 0, %s136
      %s138 = sphi 0, %s136
      %s139 = sphi 0, %s138
      %s153 = sphi 0, %s139
      %s157 = sphi 0, %s157
      %s159 = sphi 0, %s157
      %s160 = sphi 0, %s159
      %s174 = sphi 0, %s160
      %s182 = sphi 0, %s184
      %s185 = sphi 0, %s182
      %s186 = sphi 0, %s185
      %s202 = sphi 0, %s186
      %s210 = sphi 0, %s212
      %s213 = sphi 0, %s210
      %s214 = sphi 0, %s213
      %s230 = sphi 0, %s214
      %s238 = sphi 0, %s240
      %s241 = sphi 0, %s238
      %s242 = sphi 0, %s241
      %s258 = sphi 0, %s242
    $region4: #{tpu_custom_call.1} parent=1 // loop_header_branch
      %28 = sbr.rel (%p26) target = $region8
    $region5: #{tpu_custom_call.1} parent=1 // loop_body
      %s30 = ssub.s32 %s25, 1
      %s31 = ssub.s32 %s25, 2
      %s38 = sadd.s32 1, %s33
      %p39 = scmp.ge.s32.totalorder %s38, 1
      %s40 = scalar_select %p39, 0, %s38
      %s41 = sadd.s32 1, %s32
      %s42 = scalar_select %p39, %s41, %s32
      %p43 = scmp.ge.s32.totalorder %s42, 2
      %s44 = scalar_select %p43, 0, %s42
      %s45 = ssub.s32 %s32, %s44
      %s46 = ssub.s32 %s33, %s40
      %s47 = sor.u32 %s45, %s46
      %p48 = scmp.eq.s32.totalorder %s47, 0
      %s50 = sadd.s32 %s49, 1
      %s51 = scalar_select %p48, %s49, %s50
      %p54 = pneg %p48
      %p55 = scmp.eq.s32.totalorder %s25, 1
      %p56 = por %p54, %p55
      %p57 = scmp.ne.s32.totalorder %s49, %s52
      %p58 = scmp.eq.s32.totalorder %s25, 0
      %p59 = por %p57, %p58
      %p60 = scmp.ne.s32.totalorder %s49, %s52
      %p61 = scmp.eq.s32.totalorder %s30, 1
      %p62 = por %p60, %p61
      %p63 = scmp.ne.s32.totalorder %s52, %s53
      %p64 = scmp.eq.s32.totalorder %s30, 0
      %p65 = por %p63, %p64
      %p66 = scmp.ne.s32.totalorder %s52, %s53
      %p67 = scmp.eq.s32.totalorder %s31, 1
      %p68 = por %p66, %p67
      %p70 = scmp.ne.s32.totalorder %s53, %s69
      %p71 = scmp.eq.s32.totalorder %s31, 0
      %p72 = por %p70, %p71
      %s74 = sadd.s32 %s73, 1
      %p77 = scmp.eq.s32.totalorder %s25, 1
      %p78 = scmp.ne.s32.totalorder %s73, %s75
      %p79 = scmp.eq.s32.totalorder %s25, 0
      %p80 = por %p78, %p79
      %p81 = scmp.ne.s32.totalorder %s73, %s75
      %p82 = scmp.eq.s32.totalorder %s30, 1
      %p83 = por %p81, %p82
      %p84 = scmp.ne.s32.totalorder %s75, %s76
      %p85 = scmp.eq.s32.totalorder %s30, 0
      %p86 = por %p84, %p85
      %p87 = scmp.ne.s32.totalorder %s75, %s76
      %p88 = scmp.eq.s32.totalorder %s31, 1
      %p89 = por %p87, %p88
      %p91 = scmp.ne.s32.totalorder %s76, %s90
      %p92 = scmp.eq.s32.totalorder %s31, 0
      %p93 = por %p91, %p92
      %s95 = sadd.s32 %s94, 1
      %p98 = scmp.eq.s32.totalorder %s25, 1
      %p99 = scmp.ne.s32.totalorder %s94, %s96
      %p100 = scmp.eq.s32.totalorder %s25, 0
      %p101 = por %p99, %p100
      %p102 = scmp.ne.s32.totalorder %s94, %s96
      %p103 = scmp.eq.s32.totalorder %s30, 1
      %p104 = por %p102, %p103
      %p105 = scmp.ne.s32.totalorder %s96, %s97
      %p106 = scmp.eq.s32.totalorder %s30, 0
      %p107 = por %p105, %p106
      %p108 = scmp.ne.s32.totalorder %s96, %s97
      %p109 = scmp.eq.s32.totalorder %s31, 1
      %p110 = por %p108, %p109
      %p112 = scmp.ne.s32.totalorder %s97, %s111
      %p113 = scmp.eq.s32.totalorder %s31, 0
      %p114 = por %p112, %p113
      %s116 = sadd.s32 %s115, 1
      %p119 = scmp.eq.s32.totalorder %s25, 1
      %p120 = scmp.ne.s32.totalorder %s115, %s117
      %p121 = scmp.eq.s32.totalorder %s25, 0
      %p122 = por %p120, %p121
      %p123 = scmp.ne.s32.totalorder %s115, %s117
      %p124 = scmp.eq.s32.totalorder %s30, 1
      %p125 = por %p123, %p124
      %p126 = scmp.ne.s32.totalorder %s117, %s118
      %p127 = scmp.eq.s32.totalorder %s30, 0
      %p128 = por %p126, %p127
      %p129 = scmp.ne.s32.totalorder %s117, %s118
      %p130 = scmp.eq.s32.totalorder %s31, 1
      %p131 = por %p129, %p130
      %p133 = scmp.ne.s32.totalorder %s118, %s132
      %p134 = scmp.eq.s32.totalorder %s31, 0
      %p135 = por %p133, %p134
      %s137 = sadd.s32 %s136, 1
      %p140 = scmp.eq.s32.totalorder %s25, 1
      %p141 = scmp.ne.s32.totalorder %s136, %s138
      %p142 = scmp.eq.s32.totalorder %s25, 0
      %p143 = por %p141, %p142
      %p144 = scmp.ne.s32.totalorder %s136, %s138
      %p145 = scmp.eq.s32.totalorder %s30, 1
      %p146 = por %p144, %p145
      %p147 = scmp.ne.s32.totalorder %s138, %s139
      %p148 = scmp.eq.s32.totalorder %s30, 0
      %p149 = por %p147, %p148
      %p150 = scmp.ne.s32.totalorder %s138, %s139
      %p151 = scmp.eq.s32.totalorder %s31, 1
      %p152 = por %p150, %p151
      %p154 = scmp.ne.s32.totalorder %s139, %s153
      %p155 = scmp.eq.s32.totalorder %s31, 0
      %p156 = por %p154, %p155
      %s158 = sadd.s32 %s157, 1
      %p161 = scmp.eq.s32.totalorder %s25, 1
      %p162 = scmp.ne.s32.totalorder %s157, %s159
      %p163 = scmp.eq.s32.totalorder %s25, 0
      %p164 = por %p162, %p163
      %p165 = scmp.ne.s32.totalorder %s157, %s159
      %p166 = scmp.eq.s32.totalorder %s30, 1
      %p167 = por %p165, %p166
      %p168 = scmp.ne.s32.totalorder %s159, %s160
      %p169 = scmp.eq.s32.totalorder %s30, 0
      %p170 = por %p168, %p169
      %p171 = scmp.ne.s32.totalorder %s159, %s160
      %p172 = scmp.eq.s32.totalorder %s31, 1
      %p173 = por %p171, %p172
      %p175 = scmp.ne.s32.totalorder %s160, %s174
      %p176 = scmp.eq.s32.totalorder %s31, 0
      %p177 = por %p175, %p176
      %s178 = ssub.s32 %s32, %s44
      %s179 = ssub.s32 %s33, %s40
      %s180 = sor.u32 %s178, %s179
      %p181 = scmp.eq.s32.totalorder %s180, 0
      %s183 = sadd.s32 %s182, 1
      %s184 = scalar_select %p181, %s182, %s183
      %p187 = pneg %p181
      %p188 = scmp.eq.s32.totalorder %s25, 1
      %p189 = por %p187, %p188
      %p190 = scmp.ne.s32.totalorder %s182, %s185
      %p191 = scmp.eq.s32.totalorder %s25, 0
      %p192 = por %p190, %p191
      %p193 = scmp.ne.s32.totalorder %s182, %s185
      %p194 = scmp.eq.s32.totalorder %s30, 1
      %p195 = por %p193, %p194
      %p196 = scmp.ne.s32.totalorder %s185, %s186
      %p197 = scmp.eq.s32.totalorder %s30, 0
      %p198 = por %p196, %p197
      %p199 = scmp.ne.s32.totalorder %s185, %s186
      %p200 = scmp.eq.s32.totalorder %s31, 1
      %p201 = por %p199, %p200
      %p203 = scmp.ne.s32.totalorder %s186, %s202
      %p204 = scmp.eq.s32.totalorder %s31, 0
      %p205 = por %p203, %p204
      %s206 = ssub.s32 %s32, %s44
      %s207 = ssub.s32 %s33, %s40
      %s208 = sor.u32 %s206, %s207
      %p209 = scmp.eq.s32.totalorder %s208, 0
      %s211 = sadd.s32 %s210, 1
      %s212 = scalar_select %p209, %s210, %s211
      %p215 = pneg %p209
      %p216 = scmp.eq.s32.totalorder %s25, 1
      %p217 = por %p215, %p216
      %p218 = scmp.ne.s32.totalorder %s210, %s213
      %p219 = scmp.eq.s32.totalorder %s25, 0
      %p220 = por %p218, %p219
      %p221 = scmp.ne.s32.totalorder %s210, %s213
      %p222 = scmp.eq.s32.totalorder %s30, 1
      %p223 = por %p221, %p222
      %p224 = scmp.ne.s32.totalorder %s213, %s214
      %p225 = scmp.eq.s32.totalorder %s30, 0
      %p226 = por %p224, %p225
      %p227 = scmp.ne.s32.totalorder %s213, %s214
      %p228 = scmp.eq.s32.totalorder %s31, 1
      %p229 = por %p227, %p228
      %p231 = scmp.ne.s32.totalorder %s214, %s230
      %p232 = scmp.eq.s32.totalorder %s31, 0
      %p233 = por %p231, %p232
      %s234 = ssub.s32 %s32, %s44
      %s235 = ssub.s32 %s33, %s40
      %s236 = sor.u32 %s234, %s235
      %p237 = scmp.eq.s32.totalorder %s236, 0
      %s239 = sadd.s32 %s238, 1
      %s240 = scalar_select %p237, %s238, %s239
      %p243 = pneg %p237
      %p244 = scmp.eq.s32.totalorder %s25, 1
      %p245 = por %p243, %p244
      %p246 = scmp.ne.s32.totalorder %s238, %s241
      %p247 = scmp.eq.s32.totalorder %s25, 0
      %p248 = por %p246, %p247
      %p249 = scmp.ne.s32.totalorder %s238, %s241
      %p250 = scmp.eq.s32.totalorder %s30, 1
      %p251 = por %p249, %p250
      %p252 = scmp.ne.s32.totalorder %s241, %s242
      %p253 = scmp.eq.s32.totalorder %s30, 0
      %p254 = por %p252, %p253
      %p255 = scmp.ne.s32.totalorder %s241, %s242
      %p256 = scmp.eq.s32.totalorder %s31, 1
      %p257 = por %p255, %p256
      %p259 = scmp.ne.s32.totalorder %s242, %s258
      %p260 = scmp.eq.s32.totalorder %s31, 0
      %p261 = por %p259, %p260
      %p262 = scmp.le.s32.totalorder 1, %s25
      %p263 = scmp.lt.s32.totalorder %s25, 3
      %p264 = pnand %p262, %p263
      %p265 = pneg %p264
      // Predicated region
      $region9: #{tpu_custom_call.1} parent=5 // pred_check
        _
      $region10: #{tpu_custom_call.1} parent=5 // pred_check_branch
        %267 = sbr.rel (%p264) target = $region12
      $region11: #{tpu_custom_call.1} parent=5 // pred_region
        %s268 = ssub.s32 %s25, 1
        // Predicated region
        $region13: #{tpu_custom_call.1} parent=11 // pred_check
          %p269 = pneg %p86
        $region14: #{tpu_custom_call.1} parent=11 // pred_check_branch
          %271 = sbr.rel (%p269) target = $region16
        $region15: #{tpu_custom_call.1} parent=11 // pred_region
          _
        $region16: #{tpu_custom_call.1} parent=11 // pred_fallthru
          _
        // Predicated region
        $region17: #{tpu_custom_call.1} parent=11 // pred_check
          %p272 = pneg %p107
        $region18: #{tpu_custom_call.1} parent=11 // pred_check_branch
          %274 = sbr.rel (%p272) target = $region20
        $region19: #{tpu_custom_call.1} parent=11 // pred_region
          _
        $region20: #{tpu_custom_call.1} parent=11 // pred_fallthru
          _
        // Predicated region
        $region21: #{tpu_custom_call.1} parent=11 // pred_check
          %p275 = pneg %p128
        $region22: #{tpu_custom_call.1} parent=11 // pred_check_branch
          %277 = sbr.rel (%p275) target = $region24
        $region23: #{tpu_custom_call.1} parent=11 // pred_region
          %s279 = ssub.s32 256, 256
          %280 = vsyncadd [#allocation6], %s279
          %s281 = sshll.u32 [#allocation5], 4
          %s282 = int_to_ptr.vmem [resolvable:$true] %s281
          %287 = dma.hbm_to_vmem [thread:$0]  %s3, 256, %s282, [#allocation6], 64, 64, 4
        $region24: #{tpu_custom_call.1} parent=11 // pred_fallthru
          _
        // Predicated region
        $region25: #{tpu_custom_call.1} parent=11 // pred_check
          %p288 = pneg %p149
        $region26: #{tpu_custom_call.1} parent=11 // pred_check_branch
          %290 = sbr.rel (%p288) target = $region28
        $region27: #{tpu_custom_call.1} parent=11 // pred_region
          %s292 = ssub.s32 256, 256
          %293 = vsyncadd [#allocation6], %s292
          %s294 = sshll.u32 [#allocation7], 4
          %s295 = int_to_ptr.vmem [resolvable:$true] %s294
          %300 = dma.hbm_to_vmem [thread:$0]  %s4, 256, %s295, [#allocation6], 64, 64, 4
        $region28: #{tpu_custom_call.1} parent=11 // pred_fallthru
          _
        // Predicated region
        $region29: #{tpu_custom_call.1} parent=11 // pred_check
          %p301 = pneg %p170
        $region30: #{tpu_custom_call.1} parent=11 // pred_check_branch
          %303 = sbr.rel (%p301) target = $region32
        $region31: #{tpu_custom_call.1} parent=11 // pred_region
          _
        $region32: #{tpu_custom_call.1} parent=11 // pred_fallthru
          _
      $region12: #{tpu_custom_call.1} parent=5 // pred_fallthru
        _
      %p304 = scmp.lt.s32.totalorder %s25, 2
      // Predicated region
      $region33: #{tpu_custom_call.1} parent=5 // pred_check
        %p305 = pneg %p304
      $region34: #{tpu_custom_call.1} parent=5 // pred_check_branch
        %307 = sbr.rel (%p305) target = $region36
      $region35: #{tpu_custom_call.1} parent=5 // pred_region
        // Predicated region
        $region37: #{tpu_custom_call.1} parent=35 // pred_check
          %p308 = pneg %p59
        $region38: #{tpu_custom_call.1} parent=35 // pred_check_branch
          %310 = sbr.rel (%p308) target = $region40
        $region39: #{tpu_custom_call.1} parent=35 // pred_region
          %s311 = sand.u32 %s49, 1
          %s312 = scalar_lea.sflag [#allocation3], %s311
          %s313 = sand.u32 %s49, 1
          %s314 = smul.addr %s313, 8
          %s315 = scalar_lea.vmem [#allocation2], %s314
          %s317 = ssub.s32 128, 128
          %318 = vsyncadd %s312, %s317
          %s319 = sadd.s32 %s33, %s32
          %s320 = smul.addr %s319, 128
          %s321 = scalar_lea.hbm %s0, %s320
          %s323 = sshll.u32 %s315, 4
          %s324 = int_to_ptr.vmem [resolvable:$true] %s323
          %326 = dma.hbm_to_vmem [thread:$0]  %s321, 128, %s324, %s312
        $region40: #{tpu_custom_call.1} parent=35 // pred_fallthru
          _
      $region36: #{tpu_custom_call.1} parent=5 // pred_fallthru
        _
      %p327 = scmp.le.s32.totalorder 1, %s25
      %p328 = scmp.lt.s32.totalorder %s25, 3
      %p329 = pnand %p327, %p328
      %p330 = pneg %p329
      // Predicated region
      $region41: #{tpu_custom_call.1} parent=5 // pred_check
        _
      $region42: #{tpu_custom_call.1} parent=5 // pred_check_branch
        %332 = sbr.rel (%p329) target = $region44
      $region43: #{tpu_custom_call.1} parent=5 // pred_region
        %s333 = ssub.s32 %s25, 1
        %s334 = sand.u32 %s52, 1
        %s335 = scalar_lea.sflag [#allocation3], %s334
        %s336 = sand.u32 %s52, 1
        %s337 = smul.addr %s336, 8
        %s338 = scalar_lea.vmem [#allocation2], %s337
        // Predicated region
        $region45: #{tpu_custom_call.1} parent=43 // pred_check
          %p339 = pneg %p65
        $region46: #{tpu_custom_call.1} parent=43 // pred_check_branch
          %341 = sbr.rel (%p339) target = $region48
        $region47: #{tpu_custom_call.1} parent=43 // pred_region
          %342 = dma.done %s335, 128
        $region48: #{tpu_custom_call.1} parent=43 // pred_fallthru
          _
        // Predicated region
        $region49: #{tpu_custom_call.1} parent=43 // pred_check
          %p343 = pneg %p128
        $region50: #{tpu_custom_call.1} parent=43 // pred_check_branch
          %345 = sbr.rel (%p343) target = $region52
        $region51: #{tpu_custom_call.1} parent=43 // pred_region
          %346 = dma.done [#allocation6], 256
        $region52: #{tpu_custom_call.1} parent=43 // pred_fallthru
          _
        // Predicated region
        $region53: #{tpu_custom_call.1} parent=43 // pred_check
          %p347 = pneg %p149
        $region54: #{tpu_custom_call.1} parent=43 // pred_check_branch
          %349 = sbr.rel (%p347) target = $region56
        $region55: #{tpu_custom_call.1} parent=43 // pred_region
          %350 = dma.done [#allocation6], 256
        $region56: #{tpu_custom_call.1} parent=43 // pred_fallthru
          _
        %s351 = sand.u32 %s52, 1
        %s352 = scalar_lea.sflag [#allocation3], %s351
        %s353 = sand.u32 %s52, 1
        %s354 = smul.addr %s353, 8
        %s355 = scalar_lea.vmem [#allocation2], %s354
        %p356 = pneg %p65
        %p357 = pneg %p62
        %p358 = pneg %p86
        %p359 = pneg %p83
        %p360 = pneg %p107
        %p361 = pneg %p104
        %p362 = pneg %p128
        %p363 = pneg %p125
        %p364 = pneg %p149
        %p365 = pneg %p146
        %p366 = pneg %p170
        %p367 = pneg %p167
        %p368 = pneg %p198
        %p369 = pneg %p195
        %s370 = sand.u32 %s185, 1
        %s371 = scalar_lea.sflag [#allocation4], %s370
        %s372 = sand.u32 %s185, 1
        %s373 = smul.addr %s372, 16
        %s374 = scalar_lea.vmem [#allocation8], %s373
        %p375 = pneg %p226
        %p376 = pneg %p223
        %s377 = sand.u32 %s30, 1
        %s378 = scalar_lea.sflag [#allocation10], %s377
        %s379 = sand.u32 %s213, 1
        %s380 = smul.addr %s379, 16
        %s381 = scalar_lea.vmem [#allocation9], %s380
        %p382 = pneg %p254
        %p383 = pneg %p251
        %s384 = sand.u32 %s30, 1
        %s385 = scalar_lea.sflag [#allocation10], %s384
        %s386 = sand.u32 %s241, 1
        %s387 = smul.addr %s386, 16
        %s388 = scalar_lea.vmem [#allocation11], %s387
        %v390 = vld [vmem:[%s338] sm:$0xff]
        %v391 = vld [vmem:[%s1] sm:$0x1]
        %v392 = vld [vmem:[%s2] sm:$0x1]
        %vm393 = vcmask 261120
        %v394 = vsel %vm393, %v390, 0.0
        %395 = vadd.xlane.f32.xlu0 %v394
        %v396 = vpop.xlane.xlu0 %395
        %v397 = vrcp.pop 32.0
        %v398 = vmul.f32 %v396, %v397
        %v399 = vsub.f32 %v390, %v398
        %v400 = vmul.f32 %v399, %v399
        %v401 = vsel %vm393, %v400, 0.0
        %402 = vadd.xlane.f32.xlu0 %v401
        %v403 = vpop.xlane.xlu0 %402
        %v404 = vmul.f32 %v403, %v397
        %v405 = vadd.f32 %v404, 1e-05
        %v406 = vrsqrt.pop %v405
        %v407 = vmul.f32 %v405, %v406
        %vm408 = vcmp.eq.f32.partialorder %v405, inf
        %v409 = vsel %vm408, %v405, %v407
        %vm410 = vcmp.eq.f32.partialorder %v405, 0.0
        %v411 = vand.u32 %v405, 2147483648
        %v412 = vsel %vm410, %v411, %v409
        %v413 = vrcp.pop %v412
        %v414 = vmul.f32 %v399, %v413
        %v416 = vlaneseq
        %v417 = vshrl.u32 %v416, 7
        %v418 = vsub.s32 0, %v417
        %v419 = vrot.slane %v391, %v418
        %v421 = vmul.f32 %v414, %v419
        %v423 = vlaneseq
        %v424 = vshrl.u32 %v423, 7
        %v425 = vsub.s32 0, %v424
        %v426 = vrot.slane %v392, %v425
        %v428 = vadd.f32 %v421, %v426
        %v429 = vpack.c.bf16 %v428, %v428
        %v430 = vld [vmem:[#allocation5] sm:$0xf]
        %v431 = vld [vmem:[#allocation5 + $0x4] sm:$0xf]
        %v432 = vld [vmem:[#allocation5 + $0x8] sm:$0xf]
        %v433 = vld [vmem:[#allocation5 + $0xc] sm:$0xf]
        %v438 = vunpack.c.l.b16 %v430
        %v439 = vunpack.c.l.b16 %v431
        %v440 = vunpack.c.l.b16 %v432
        %v441 = vunpack.c.l.b16 %v433
        %v442 = vpack.c.b16 %v439, %v438
        %v443 = vpack.c.b16 %v441, %v440
        %v447 = vsel %vm393, %v429, 0
        %449 = vmatprep.subr.bf16.mxu0 0
        %450 = vmatpush1.bf16.msra.mxu0 %v442
        %451 = vmatprep.subr.bf16.mxu0 0
        %452 = vmatpush1.bf16.msra.mxu0 %v443
        %453 = vmatprep.subr.bf16.mxu0 0
        %454 = vmatpush1.bf16.msra.mxu0 0
        %455 = vmatprep.subr.bf16.mxu0 0
        %456 = vmatpush1.bf16.msra.mxu0 0
        %457 = vmatprep.subr.bf16.mxu0 0
        %458 = vmatpush1.bf16.msra.mxu0 0
        %459 = vmatprep.subr.bf16.mxu0 0
        %460 = vmatpush1.bf16.msra.mxu0 0
        %461 = vmatprep.subr.bf16.mxu0 0
        %462 = vmatpush1.bf16.msra.mxu0 0
        %463 = vmatprep.subr.bf16.mxu0 0
        %464 = vmatpush1.bf16.msra.mxu0 0
        %465 = vmatprep.subr.bf16.mxu0 0
        %466 = vmatpush1.bf16.msra.mxu0 0
        %467 = vmatprep.subr.bf16.mxu0 0
        %468 = vmatpush1.bf16.msra.mxu0 0
        %469 = vmatprep.subr.bf16.mxu0 0
        %470 = vmatpush1.bf16.msra.mxu0 0
        %471 = vmatprep.subr.bf16.mxu0 0
        %472 = vmatpush1.bf16.msra.mxu0 0
        %473 = vmatprep.subr.bf16.mxu0 0
        %474 = vmatpush1.bf16.msra.mxu0 0
        %475 = vmatprep.subr.bf16.mxu0 0
        %476 = vmatpush1.bf16.msra.mxu0 0
        %477 = vmatprep.subr.bf16.mxu0 0
        %478 = vmatpush1.bf16.msra.mxu0 0
        %479 = vmatprep.subr.bf16.mxu0 0
        %480 = vmatpush1.bf16.msra.mxu0 0
        %481 = vmatprep.mubr.bf16.mxu0 0
        %482 = vmatmul.mubr.bf16.gmra.mrb[0].mxu0 %v447
        %v483 = vpop.f32.mrb[0].mxu0
        %v484 = vadd.f32 0.0, %v483
        %v485 = vpop.f32.mrb[0].mxu0
        %v486 = vpop.f32.mrb[0].mxu0
        %v487 = vpop.f32.mrb[0].mxu0
        %488 = vdwg.mxu0
        %v489 = vmul.f32 %v484, 0.35355338
        %v490 = vld [vmem:[#allocation7] sm:$0xf]
        %v491 = vld [vmem:[#allocation7 + $0x4] sm:$0xf]
        %v492 = vld [vmem:[#allocation7 + $0x8] sm:$0xf]
        %v493 = vld [vmem:[#allocation7 + $0xc] sm:$0xf]
        %v498 = vunpack.c.l.b16 %v490
        %v499 = vunpack.c.l.b16 %v491
        %v500 = vunpack.c.l.b16 %v492
        %v501 = vunpack.c.l.b16 %v493
        %v502 = vpack.c.b16 %v499, %v498
        %v503 = vpack.c.b16 %v501, %v500
        %506 = vmatprep.subr.bf16.mxu0 0
        %507 = vmatpush1.bf16.msra.mxu0 %v502
        %508 = vmatprep.subr.bf16.mxu0 0
        %509 = vmatpush1.bf16.msra.mxu0 %v503
        %510 = vmatprep.subr.bf16.mxu0 0
        %511 = vmatpush1.bf16.msra.mxu0 0
        %512 = vmatprep.subr.bf16.mxu0 0
        %513 = vmatpush1.bf16.msra.mxu0 0
        %514 = vmatprep.subr.bf16.mxu0 0
        %515 = vmatpush1.bf16.msra.mxu0 0
        %516 = vmatprep.subr.bf16.mxu0 0
        %517 = vmatpush1.bf16.msra.mxu0 0
        %518 = vmatprep.subr.bf16.mxu0 0
        %519 = vmatpush1.bf16.msra.mxu0 0
        %520 = vmatprep.subr.bf16.mxu0 0
        %521 = vmatpush1.bf16.msra.mxu0 0
        %522 = vmatprep.subr.bf16.mxu0 0
        %523 = vmatpush1.bf16.msra.mxu0 0
        %524 = vmatprep.subr.bf16.mxu0 0
        %525 = vmatpush1.bf16.msra.mxu0 0
        %526 = vmatprep.subr.bf16.mxu0 0
        %527 = vmatpush1.bf16.msra.mxu0 0
        %528 = vmatprep.subr.bf16.mxu0 0
        %529 = vmatpush1.bf16.msra.mxu0 0
        %530 = vmatprep.subr.bf16.mxu0 0
        %531 = vmatpush1.bf16.msra.mxu0 0
        %532 = vmatprep.subr.bf16.mxu0 0
        %533 = vmatpush1.bf16.msra.mxu0 0
        %534 = vmatprep.subr.bf16.mxu0 0
        %535 = vmatpush1.bf16.msra.mxu0 0
        %536 = vmatprep.subr.bf16.mxu0 0
        %537 = vmatpush1.bf16.msra.mxu0 0
        %538 = vmatprep.mubr.bf16.mxu0 0
        %539 = vmatmul.mubr.bf16.gmra.mrb[0].mxu0 %v447
        %v540 = vpop.f32.mrb[0].mxu0
        %v541 = vadd.f32 0.0, %v540
        %v542 = vpop.f32.mrb[0].mxu0
        %v543 = vpop.f32.mrb[0].mxu0
        %v544 = vpop.f32.mrb[0].mxu0
        %545 = vdwg.mxu0
        %v546 = vld [vmem:[%s5] sm:$0xf]
        %v547 = vld [vmem:[%s5 + $0x4] sm:$0xf]
        %v548 = vld [vmem:[%s5 + $0x8] sm:$0xf]
        %v549 = vld [vmem:[%s5 + $0xc] sm:$0xf]
        %v554 = vunpack.c.l.b16 %v546
        %v555 = vunpack.c.l.b16 %v547
        %v556 = vunpack.c.l.b16 %v548
        %v557 = vunpack.c.l.b16 %v549
        %v558 = vpack.c.b16 %v555, %v554
        %v559 = vpack.c.b16 %v557, %v556
        %562 = vmatprep.subr.bf16.mxu0 0
        %563 = vmatpush1.bf16.msra.mxu0 %v558
        %564 = vmatprep.subr.bf16.mxu0 0
        %565 = vmatpush1.bf16.msra.mxu0 %v559
        %566 = vmatprep.subr.bf16.mxu0 0
        %567 = vmatpush1.bf16.msra.mxu0 0
        %568 = vmatprep.subr.bf16.mxu0 0
        %569 = vmatpush1.bf16.msra.mxu0 0
        %570 = vmatprep.subr.bf16.mxu0 0
        %571 = vmatpush1.bf16.msra.mxu0 0
        %572 = vmatprep.subr.bf16.mxu0 0
        %573 = vmatpush1.bf16.msra.mxu0 0
        %574 = vmatprep.subr.bf16.mxu0 0
        %575 = vmatpush1.bf16.msra.mxu0 0
        %576 = vmatprep.subr.bf16.mxu0 0
        %577 = vmatpush1.bf16.msra.mxu0 0
        %578 = vmatprep.subr.bf16.mxu0 0
        %579 = vmatpush1.bf16.msra.mxu0 0
        %580 = vmatprep.subr.bf16.mxu0 0
        %581 = vmatpush1.bf16.msra.mxu0 0
        %582 = vmatprep.subr.bf16.mxu0 0
        %583 = vmatpush1.bf16.msra.mxu0 0
        %584 = vmatprep.subr.bf16.mxu0 0
        %585 = vmatpush1.bf16.msra.mxu0 0
        %586 = vmatprep.subr.bf16.mxu0 0
        %587 = vmatpush1.bf16.msra.mxu0 0
        %588 = vmatprep.subr.bf16.mxu0 0
        %589 = vmatpush1.bf16.msra.mxu0 0
        %590 = vmatprep.subr.bf16.mxu0 0
        %591 = vmatpush1.bf16.msra.mxu0 0
        %592 = vmatprep.subr.bf16.mxu0 0
        %593 = vmatpush1.bf16.msra.mxu0 0
        %594 = vmatprep.mubr.bf16.mxu0 0
        %595 = vmatmul.mubr.bf16.gmra.mrb[0].mxu0 %v447
        %v596 = vpop.f32.mrb[0].mxu0
        %v597 = vadd.f32 0.0, %v596
        %v598 = vpop.f32.mrb[0].mxu0
        %v599 = vpop.f32.mrb[0].mxu0
        %v600 = vpop.f32.mrb[0].mxu0
        %601 = vdwg.mxu0
        %v602 = vpack.c.bf16 %v489, %v489
        %604 = vrot.lane.b32.xlu0 %v602, 120
        %v605 = vpop.permute.xlu0 %604
        %606 = vrot.lane.b32.xlu0 %v602, 112
        %v607 = vpop.permute.xlu0 %606
        %608 = vrot.lane.b32.xlu0 %v602, 104
        %v609 = vpop.permute.xlu0 %608
        %v611 = vunpack.c.l.s4 1983009808
        %v612 = vunpack.c.0.s8 %v611
        %v613 = vlaneseq
        %v614 = vshrl.u32 %v613, 7
        %v615 = vsub.s32 %v612, %v614
        %v616 = vrot.slane %v602, %v615
        %v619 = vunpack.c.l.s4 1983009808
        %v620 = vunpack.c.0.s8 %v619
        %v621 = vlaneseq
        %v622 = vshrl.u32 %v621, 7
        %v623 = vsub.s32 %v620, %v622
        %v624 = vrot.slane %v607, %v623
        %v625 = vcombine.low %v616, %v624
        %v626 = vcombine.high %v616, %v624
        %v628 = vunpack.c.l.s4 1934713408
        %v629 = vunpack.c.0.s8 %v628
        %v630 = vlaneseq
        %v631 = vshrl.u32 %v630, 7
        %v632 = vsub.s32 %v629, %v631
        %v633 = vrot.slane %v625, %v632
        %v635 = vunpack.c.l.s4 1934713408
        %v636 = vunpack.c.0.s8 %v635
        %v637 = vlaneseq
        %v638 = vshrl.u32 %v637, 7
        %v639 = vsub.s32 %v636, %v638
        %v640 = vrot.slane %v626, %v639
        %v641 = vcombine.high %v633, 0
        %v642 = vcombine.high %v640, 0
        %v645 = vunpack.c.l.s4 1983009808
        %v646 = vunpack.c.0.s8 %v645
        %v647 = vlaneseq
        %v648 = vshrl.u32 %v647, 7
        %v649 = vsub.s32 %v646, %v648
        %v650 = vrot.slane %v605, %v649
        %v653 = vunpack.c.l.s4 1983009808
        %v654 = vunpack.c.0.s8 %v653
        %v655 = vlaneseq
        %v656 = vshrl.u32 %v655, 7
        %v657 = vsub.s32 %v654, %v656
        %v658 = vrot.slane %v609, %v657
        %v659 = vcombine.low %v650, %v658
        %v660 = vcombine.high %v650, %v658
        %v662 = vunpack.c.l.s4 1934713408
        %v663 = vunpack.c.0.s8 %v662
        %v664 = vlaneseq
        %v665 = vshrl.u32 %v664, 7
        %v666 = vsub.s32 %v663, %v665
        %v667 = vrot.slane %v659, %v666
        %v669 = vunpack.c.l.s4 1934713408
        %v670 = vunpack.c.0.s8 %v669
        %v671 = vlaneseq
        %v672 = vshrl.u32 %v671, 7
        %v673 = vsub.s32 %v670, %v672
        %v674 = vrot.slane %v660, %v673
        %v675 = vcombine.high %v667, 0
        %v676 = vcombine.high %v674, 0
        %v679 = vpack.i.b16 %v667, %v633
        %v681 = vshrl.u32 %v633, 16
        %v682 = vshrl.u32 %v667, 16
        %v683 = vpack.i.b16 %v682, %v681
        %v687 = vpack.i.b16 %v675, %v641
        %v689 = vshrl.u32 %v641, 16
        %v690 = vshrl.u32 %v675, 16
        %v691 = vpack.i.b16 %v690, %v689
        %v695 = vpack.i.b16 %v674, %v640
        %v697 = vshrl.u32 %v640, 16
        %v698 = vshrl.u32 %v674, 16
        %v699 = vpack.i.b16 %v698, %v697
        %v703 = vpack.i.b16 %v676, %v642
        %v705 = vshrl.u32 %v642, 16
        %v706 = vshrl.u32 %v676, 16
        %v707 = vpack.i.b16 %v706, %v705
        %v709 = vcombine.low %v679, %v695
        %v711 = vunpack.c.l.s4 1983009808
        %v712 = vunpack.c.0.s8 %v711
        %v713 = vlaneseq
        %v714 = vshrl.u32 %v713, 7
        %v715 = vsub.s32 %v712, %v714
        %v716 = vrot.slane %v709, %v715
        %v717 = vcombine.low %v687, %v703
        %v719 = vunpack.c.l.s4 1983009808
        %v720 = vunpack.c.0.s8 %v719
        %v721 = vlaneseq
        %v722 = vshrl.u32 %v721, 7
        %v723 = vsub.s32 %v720, %v722
        %v724 = vrot.slane %v717, %v723
        %v725 = vcombine.low %v716, %v724
        %v727 = vunpack.c.l.s4 1934713408
        %v728 = vunpack.c.0.s8 %v727
        %v729 = vlaneseq
        %v730 = vshrl.u32 %v729, 7
        %v731 = vsub.s32 %v728, %v730
        %v732 = vrot.slane %v725, %v731
        %v733 = vcombine.high %v732, 0
        %v734 = vcombine.low %v683, %v699
        %v736 = vunpack.c.l.s4 1983009808
        %v737 = vunpack.c.0.s8 %v736
        %v738 = vlaneseq
        %v739 = vshrl.u32 %v738, 7
        %v740 = vsub.s32 %v737, %v739
        %v741 = vrot.slane %v734, %v740
        %v742 = vcombine.low %v691, %v707
        %v744 = vunpack.c.l.s4 1983009808
        %v745 = vunpack.c.0.s8 %v744
        %v746 = vlaneseq
        %v747 = vshrl.u32 %v746, 7
        %v748 = vsub.s32 %v745, %v747
        %v749 = vrot.slane %v742, %v748
        %v750 = vcombine.low %v741, %v749
        %v752 = vunpack.c.l.s4 1934713408
        %v753 = vunpack.c.0.s8 %v752
        %v754 = vlaneseq
        %v755 = vshrl.u32 %v754, 7
        %v756 = vsub.s32 %v753, %v755
        %v757 = vrot.slane %v750, %v756
        %v758 = vcombine.high %v757, 0
        %v761 = vpack.i.b16 %v757, %v732
        %v763 = vshrl.u32 %v732, 16
        %v764 = vshrl.u32 %v757, 16
        %v765 = vpack.i.b16 %v764, %v763
        %v769 = vpack.i.b16 %v758, %v733
        %v771 = vshrl.u32 %v733, 16
        %v772 = vshrl.u32 %v758, 16
        %v773 = vpack.i.b16 %v772, %v771
        %vm775 = vcmask 60416
        %776 = vst.msk [vmem:[%s374] sm:$0xf] %vm775, %v761
        %777 = vst.msk [vmem:[%s374 + $0x4] sm:$0xf] %vm775, %v765
        %778 = vst.msk [vmem:[%s374 + $0x8] sm:$0xf] %vm775, %v769
        %779 = vst.msk [vmem:[%s374 + $0xc] sm:$0xf] %vm775, %v773
        %v780 = vpack.c.bf16 %v541, %v541
        %782 = vrot.lane.b32.xlu0 %v780, 120
        %v783 = vpop.permute.xlu0 %782
        %784 = vrot.lane.b32.xlu0 %v780, 112
        %v785 = vpop.permute.xlu0 %784
        %786 = vrot.lane.b32.xlu0 %v780, 104
        %v787 = vpop.permute.xlu0 %786
        %v789 = vunpack.c.l.s4 1983009808
        %v790 = vunpack.c.0.s8 %v789
        %v791 = vlaneseq
        %v792 = vshrl.u32 %v791, 7
        %v793 = vsub.s32 %v790, %v792
        %v794 = vrot.slane %v780, %v793
        %v797 = vunpack.c.l.s4 1983009808
        %v798 = vunpack.c.0.s8 %v797
        %v799 = vlaneseq
        %v800 = vshrl.u32 %v799, 7
        %v801 = vsub.s32 %v798, %v800
        %v802 = vrot.slane %v785, %v801
        %v803 = vcombine.low %v794, %v802
        %v804 = vcombine.high %v794, %v802
        %v806 = vunpack.c.l.s4 1934713408
        %v807 = vunpack.c.0.s8 %v806
        %v808 = vlaneseq
        %v809 = vshrl.u32 %v808, 7
        %v810 = vsub.s32 %v807, %v809
        %v811 = vrot.slane %v803, %v810
        %v813 = vunpack.c.l.s4 1934713408
        %v814 = vunpack.c.0.s8 %v813
        %v815 = vlaneseq
        %v816 = vshrl.u32 %v815, 7
        %v817 = vsub.s32 %v814, %v816
        %v818 = vrot.slane %v804, %v817
        %v819 = vcombine.high %v811, 0
        %v820 = vcombine.high %v818, 0
        %v823 = vunpack.c.l.s4 1983009808
        %v824 = vunpack.c.0.s8 %v823
        %v825 = vlaneseq
        %v826 = vshrl.u32 %v825, 7
        %v827 = vsub.s32 %v824, %v826
        %v828 = vrot.slane %v783, %v827
        %v831 = vunpack.c.l.s4 1983009808
        %v832 = vunpack.c.0.s8 %v831
        %v833 = vlaneseq
        %v834 = vshrl.u32 %v833, 7
        %v835 = vsub.s32 %v832, %v834
        %v836 = vrot.slane %v787, %v835
        %v837 = vcombine.low %v828, %v836
        %v838 = vcombine.high %v828, %v836
        %v840 = vunpack.c.l.s4 1934713408
        %v841 = vunpack.c.0.s8 %v840
        %v842 = vlaneseq
        %v843 = vshrl.u32 %v842, 7
        %v844 = vsub.s32 %v841, %v843
        %v845 = vrot.slane %v837, %v844
        %v847 = vunpack.c.l.s4 1934713408
        %v848 = vunpack.c.0.s8 %v847
        %v849 = vlaneseq
        %v850 = vshrl.u32 %v849, 7
        %v851 = vsub.s32 %v848, %v850
        %v852 = vrot.slane %v838, %v851
        %v853 = vcombine.high %v845, 0
        %v854 = vcombine.high %v852, 0
        %v857 = vpack.i.b16 %v845, %v811
        %v859 = vshrl.u32 %v811, 16
        %v860 = vshrl.u32 %v845, 16
        %v861 = vpack.i.b16 %v860, %v859
        %v865 = vpack.i.b16 %v853, %v819
        %v867 = vshrl.u32 %v819, 16
        %v868 = vshrl.u32 %v853, 16
        %v869 = vpack.i.b16 %v868, %v867
        %v873 = vpack.i.b16 %v852, %v818
        %v875 = vshrl.u32 %v818, 16
        %v876 = vshrl.u32 %v852, 16
        %v877 = vpack.i.b16 %v876, %v875
        %v881 = vpack.i.b16 %v854, %v820
        %v883 = vshrl.u32 %v820, 16
        %v884 = vshrl.u32 %v854, 16
        %v885 = vpack.i.b16 %v884, %v883
        %v887 = vcombine.low %v857, %v873
        %v889 = vunpack.c.l.s4 1983009808
        %v890 = vunpack.c.0.s8 %v889
        %v891 = vlaneseq
        %v892 = vshrl.u32 %v891, 7
        %v893 = vsub.s32 %v890, %v892
        %v894 = vrot.slane %v887, %v893
        %v895 = vcombine.low %v865, %v881
        %v897 = vunpack.c.l.s4 1983009808
        %v898 = vunpack.c.0.s8 %v897
        %v899 = vlaneseq
        %v900 = vshrl.u32 %v899, 7
        %v901 = vsub.s32 %v898, %v900
        %v902 = vrot.slane %v895, %v901
        %v903 = vcombine.low %v894, %v902
        %v905 = vunpack.c.l.s4 1934713408
        %v906 = vunpack.c.0.s8 %v905
        %v907 = vlaneseq
        %v908 = vshrl.u32 %v907, 7
        %v909 = vsub.s32 %v906, %v908
        %v910 = vrot.slane %v903, %v909
        %v911 = vcombine.high %v910, 0
        %v912 = vcombine.low %v861, %v877
        %v914 = vunpack.c.l.s4 1983009808
        %v915 = vunpack.c.0.s8 %v914
        %v916 = vlaneseq
        %v917 = vshrl.u32 %v916, 7
        %v918 = vsub.s32 %v915, %v917
        %v919 = vrot.slane %v912, %v918
        %v920 = vcombine.low %v869, %v885
        %v922 = vunpack.c.l.s4 1983009808
        %v923 = vunpack.c.0.s8 %v922
        %v924 = vlaneseq
        %v925 = vshrl.u32 %v924, 7
        %v926 = vsub.s32 %v923, %v925
        %v927 = vrot.slane %v920, %v926
        %v928 = vcombine.low %v919, %v927
        %v930 = vunpack.c.l.s4 1934713408
        %v931 = vunpack.c.0.s8 %v930
        %v932 = vlaneseq
        %v933 = vshrl.u32 %v932, 7
        %v934 = vsub.s32 %v931, %v933
        %v935 = vrot.slane %v928, %v934
        %v936 = vcombine.high %v935, 0
        %v939 = vpack.i.b16 %v935, %v910
        %v941 = vshrl.u32 %v910, 16
        %v942 = vshrl.u32 %v935, 16
        %v943 = vpack.i.b16 %v942, %v941
        %v947 = vpack.i.b16 %v936, %v911
        %v949 = vshrl.u32 %v911, 16
        %v950 = vshrl.u32 %v936, 16
        %v951 = vpack.i.b16 %v950, %v949
        %953 = vst.msk [vmem:[%s381] sm:$0xf] %vm775, %v939
        %954 = vst.msk [vmem:[%s381 + $0x4] sm:$0xf] %vm775, %v943
        %955 = vst.msk [vmem:[%s381 + $0x8] sm:$0xf] %vm775, %v947
        %956 = vst.msk [vmem:[%s381 + $0xc] sm:$0xf] %vm775, %v951
        %v957 = vpack.c.bf16 %v597, %v597
        %959 = vrot.lane.b32.xlu0 %v957, 120
        %v960 = vpop.permute.xlu0 %959
        %961 = vrot.lane.b32.xlu0 %v957, 112
        %v962 = vpop.permute.xlu0 %961
        %963 = vrot.lane.b32.xlu0 %v957, 104
        %v964 = vpop.permute.xlu0 %963
        %v966 = vunpack.c.l.s4 1983009808
        %v967 = vunpack.c.0.s8 %v966
        %v968 = vlaneseq
        %v969 = vshrl.u32 %v968, 7
        %v970 = vsub.s32 %v967, %v969
        %v971 = vrot.slane %v957, %v970
        %v974 = vunpack.c.l.s4 1983009808
        %v975 = vunpack.c.0.s8 %v974
        %v976 = vlaneseq
        %v977 = vshrl.u32 %v976, 7
        %v978 = vsub.s32 %v975, %v977
        %v979 = vrot.slane %v962, %v978
        %v980 = vcombine.low %v971, %v979
        %v981 = vcombine.high %v971, %v979
        %v983 = vunpack.c.l.s4 1934713408
        %v984 = vunpack.c.0.s8 %v983
        %v985 = vlaneseq
        %v986 = vshrl.u32 %v985, 7
        %v987 = vsub.s32 %v984, %v986
        %v988 = vrot.slane %v980, %v987
        %v990 = vunpack.c.l.s4 1934713408
        %v991 = vunpack.c.0.s8 %v990
        %v992 = vlaneseq
        %v993 = vshrl.u32 %v992, 7
        %v994 = vsub.s32 %v991, %v993
        %v995 = vrot.slane %v981, %v994
        %v996 = vcombine.high %v988, 0
        %v997 = vcombine.high %v995, 0
        %v1000 = vunpack.c.l.s4 1983009808
        %v1001 = vunpack.c.0.s8 %v1000
        %v1002 = vlaneseq
        %v1003 = vshrl.u32 %v1002, 7
        %v1004 = vsub.s32 %v1001, %v1003
        %v1005 = vrot.slane %v960, %v1004
        %v1008 = vunpack.c.l.s4 1983009808
        %v1009 = vunpack.c.0.s8 %v1008
        %v1010 = vlaneseq
        %v1011 = vshrl.u32 %v1010, 7
        %v1012 = vsub.s32 %v1009, %v1011
        %v1013 = vrot.slane %v964, %v1012
        %v1014 = vcombine.low %v1005, %v1013
        %v1015 = vcombine.high %v1005, %v1013
        %v1017 = vunpack.c.l.s4 1934713408
        %v1018 = vunpack.c.0.s8 %v1017
        %v1019 = vlaneseq
        %v1020 = vshrl.u32 %v1019, 7
        %v1021 = vsub.s32 %v1018, %v1020
        %v1022 = vrot.slane %v1014, %v1021
        %v1024 = vunpack.c.l.s4 1934713408
        %v1025 = vunpack.c.0.s8 %v1024
        %v1026 = vlaneseq
        %v1027 = vshrl.u32 %v1026, 7
        %v1028 = vsub.s32 %v1025, %v1027
        %v1029 = vrot.slane %v1015, %v1028
        %v1030 = vcombine.high %v1022, 0
        %v1031 = vcombine.high %v1029, 0
        %v1034 = vpack.i.b16 %v1022, %v988
        %v1036 = vshrl.u32 %v988, 16
        %v1037 = vshrl.u32 %v1022, 16
        %v1038 = vpack.i.b16 %v1037, %v1036
        %v1042 = vpack.i.b16 %v1030, %v996
        %v1044 = vshrl.u32 %v996, 16
        %v1045 = vshrl.u32 %v1030, 16
        %v1046 = vpack.i.b16 %v1045, %v1044
        %v1050 = vpack.i.b16 %v1029, %v995
        %v1052 = vshrl.u32 %v995, 16
        %v1053 = vshrl.u32 %v1029, 16
        %v1054 = vpack.i.b16 %v1053, %v1052
        %v1058 = vpack.i.b16 %v1031, %v997
        %v1060 = vshrl.u32 %v997, 16
        %v1061 = vshrl.u32 %v1031, 16
        %v1062 = vpack.i.b16 %v1061, %v1060
        %v1064 = vcombine.low %v1034, %v1050
        %v1066 = vunpack.c.l.s4 1983009808
        %v1067 = vunpack.c.0.s8 %v1066
        %v1068 = vlaneseq
        %v1069 = vshrl.u32 %v1068, 7
        %v1070 = vsub.s32 %v1067, %v1069
        %v1071 = vrot.slane %v1064, %v1070
        %v1072 = vcombine.low %v1042, %v1058
        %v1074 = vunpack.c.l.s4 1983009808
        %v1075 = vunpack.c.0.s8 %v1074
        %v1076 = vlaneseq
        %v1077 = vshrl.u32 %v1076, 7
        %v1078 = vsub.s32 %v1075, %v1077
        %v1079 = vrot.slane %v1072, %v1078
        %v1080 = vcombine.low %v1071, %v1079
        %v1082 = vunpack.c.l.s4 1934713408
        %v1083 = vunpack.c.0.s8 %v1082
        %v1084 = vlaneseq
        %v1085 = vshrl.u32 %v1084, 7
        %v1086 = vsub.s32 %v1083, %v1085
        %v1087 = vrot.slane %v1080, %v1086
        %v1088 = vcombine.high %v1087, 0
        %v1089 = vcombine.low %v1038, %v1054
        %v1091 = vunpack.c.l.s4 1983009808
        %v1092 = vunpack.c.0.s8 %v1091
        %v1093 = vlaneseq
        %v1094 = vshrl.u32 %v1093, 7
        %v1095 = vsub.s32 %v1092, %v1094
        %v1096 = vrot.slane %v1089, %v1095
        %v1097 = vcombine.low %v1046, %v1062
        %v1099 = vunpack.c.l.s4 1983009808
        %v1100 = vunpack.c.0.s8 %v1099
        %v1101 = vlaneseq
        %v1102 = vshrl.u32 %v1101, 7
        %v1103 = vsub.s32 %v1100, %v1102
        %v1104 = vrot.slane %v1097, %v1103
        %v1105 = vcombine.low %v1096, %v1104
        %v1107 = vunpack.c.l.s4 1934713408
        %v1108 = vunpack.c.0.s8 %v1107
        %v1109 = vlaneseq
        %v1110 = vshrl.u32 %v1109, 7
        %v1111 = vsub.s32 %v1108, %v1110
        %v1112 = vrot.slane %v1105, %v1111
        %v1113 = vcombine.high %v1112, 0
        %v1116 = vpack.i.b16 %v1112, %v1087
        %v1118 = vshrl.u32 %v1087, 16
        %v1119 = vshrl.u32 %v1112, 16
        %v1120 = vpack.i.b16 %v1119, %v1118
        %v1124 = vpack.i.b16 %v1113, %v1088
        %v1126 = vshrl.u32 %v1088, 16
        %v1127 = vshrl.u32 %v1113, 16
        %v1128 = vpack.i.b16 %v1127, %v1126
        %1130 = vst.msk [vmem:[%s388] sm:$0xf] %vm775, %v1116
        %1131 = vst.msk [vmem:[%s388 + $0x4] sm:$0xf] %vm775, %v1120
        %1132 = vst.msk [vmem:[%s388 + $0x8] sm:$0xf] %vm775, %v1124
        %1133 = vst.msk [vmem:[%s388 + $0xc] sm:$0xf] %vm775, %v1128
        %s1134 = sand.u32 %s185, 1
        %s1135 = scalar_lea.sflag [#allocation4], %s1134
        %s1136 = sand.u32 %s185, 1
        %s1137 = smul.addr %s1136, 16
        %s1138 = scalar_lea.vmem [#allocation8], %s1137
        %s1139 = sand.u32 %s30, 1
        %s1140 = scalar_lea.sflag [#allocation10], %s1139
        %s1141 = sand.u32 %s213, 1
        %s1142 = smul.addr %s1141, 16
        %s1143 = scalar_lea.vmem [#allocation9], %s1142
        %s1144 = sand.u32 %s30, 1
        %s1145 = scalar_lea.sflag [#allocation10], %s1144
        %s1146 = sand.u32 %s241, 1
        %s1147 = smul.addr %s1146, 16
        %s1148 = scalar_lea.vmem [#allocation11], %s1147
        // Predicated region
        $region57: #{tpu_custom_call.1} parent=43 // pred_check
          %p1149 = pneg %p195
        $region58: #{tpu_custom_call.1} parent=43 // pred_check_branch
          %1151 = sbr.rel (%p1149) target = $region60
        $region59: #{tpu_custom_call.1} parent=43 // pred_region
          %s1153 = ssub.s32 256, 256
          %1154 = vsyncadd %s1135, %s1153
          %s1155 = smul.addr %s34, 4
          %s1156 = sadd.s32 %s35, %s1155
          %s1157 = smul.addr %s1156, 64
          %s1158 = scalar_lea.hbm %s6, %s1157
          %s1159 = sshll.u32 %s1138, 4
          %s1160 = int_to_ptr.vmem [resolvable:$true] %s1159
          %1165 = dma.vmem_to_hbm [thread:$0]  %s1160, 256, %s1158, %s1135, 64, 64, 4
        $region60: #{tpu_custom_call.1} parent=43 // pred_fallthru
          _
        // Predicated region
        $region61: #{tpu_custom_call.1} parent=43 // pred_check
          %p1166 = pneg %p223
        $region62: #{tpu_custom_call.1} parent=43 // pred_check_branch
          %1168 = sbr.rel (%p1166) target = $region64
        $region63: #{tpu_custom_call.1} parent=43 // pred_region
          %s1170 = ssub.s32 256, 256
          %1171 = vsyncadd %s1140, %s1170
          %s1172 = smul.addr %s34, 4
          %s1173 = sadd.s32 %s35, %s1172
          %s1174 = smul.addr %s1173, 64
          %s1175 = scalar_lea.hbm %s7, %s1174
          %s1176 = sshll.u32 %s1143, 4
          %s1177 = int_to_ptr.vmem [resolvable:$true] %s1176
          %1182 = dma.vmem_to_hbm [thread:$0]  %s1177, 256, %s1175, %s1140, 64, 64, 4
        $region64: #{tpu_custom_call.1} parent=43 // pred_fallthru
          _
        // Predicated region
        $region65: #{tpu_custom_call.1} parent=43 // pred_check
          %p1183 = pneg %p251
        $region66: #{tpu_custom_call.1} parent=43 // pred_check_branch
          %1185 = sbr.rel (%p1183) target = $region68
        $region67: #{tpu_custom_call.1} parent=43 // pred_region
          %s1187 = ssub.s32 256, 256
          %1188 = vsyncadd %s1145, %s1187
          %s1189 = smul.addr %s34, 4
          %s1190 = sadd.s32 %s35, %s1189
          %s1191 = smul.addr %s1190, 64
          %s1192 = scalar_lea.hbm %s8, %s1191
          %s1193 = sshll.u32 %s1148, 4
          %s1194 = int_to_ptr.vmem [resolvable:$true] %s1193
          %1199 = dma.vmem_to_hbm [thread:$0]  %s1194, 256, %s1192, %s1145, 64, 64, 4
        $region68: #{tpu_custom_call.1} parent=43 // pred_fallthru
          _
      $region44: #{tpu_custom_call.1} parent=5 // pred_fallthru
        _
      %p1200 = scmp.le.s32.totalorder 2, %s25
      // Predicated region
      $region69: #{tpu_custom_call.1} parent=5 // pred_check
        %p1201 = pneg %p1200
      $region70: #{tpu_custom_call.1} parent=5 // pred_check_branch
        %1203 = sbr.rel (%p1201) target = $region72
      $region71: #{tpu_custom_call.1} parent=5 // pred_region
        %s1204 = ssub.s32 %s25, 2
        // Predicated region
        $region73: #{tpu_custom_call.1} parent=71 // pred_check
          %p1205 = pneg %p201
        $region74: #{tpu_custom_call.1} parent=71 // pred_check_branch
          %1207 = sbr.rel (%p1205) target = $region76
        $region75: #{tpu_custom_call.1} parent=71 // pred_region
          %s1208 = sand.u32 %s186, 1
          %s1209 = scalar_lea.sflag [#allocation4], %s1208
          %s1210 = sand.u32 %s186, 1
          %s1211 = smul.addr %s1210, 16
          %s1212 = scalar_lea.vmem [#allocation8], %s1211
          %1213 = dma.done %s1209, 256
        $region76: #{tpu_custom_call.1} parent=71 // pred_fallthru
          _
        // Predicated region
        $region77: #{tpu_custom_call.1} parent=71 // pred_check
          %p1214 = pneg %p229
        $region78: #{tpu_custom_call.1} parent=71 // pred_check_branch
          %1216 = sbr.rel (%p1214) target = $region80
        $region79: #{tpu_custom_call.1} parent=71 // pred_region
          %s1217 = sand.u32 %s31, 1
          %s1218 = scalar_lea.sflag [#allocation10], %s1217
          %s1219 = sand.u32 %s214, 1
          %s1220 = smul.addr %s1219, 16
          %s1221 = scalar_lea.vmem [#allocation9], %s1220
          %1222 = dma.done %s1218, 256
        $region80: #{tpu_custom_call.1} parent=71 // pred_fallthru
          _
        // Predicated region
        $region81: #{tpu_custom_call.1} parent=71 // pred_check
          %p1223 = pneg %p257
        $region82: #{tpu_custom_call.1} parent=71 // pred_check_branch
          %1225 = sbr.rel (%p1223) target = $region84
        $region83: #{tpu_custom_call.1} parent=71 // pred_region
          %s1226 = sand.u32 %s31, 1
          %s1227 = scalar_lea.sflag [#allocation10], %s1226
          %s1228 = sand.u32 %s242, 1
          %s1229 = smul.addr %s1228, 16
          %s1230 = scalar_lea.vmem [#allocation11], %s1229
          %1231 = dma.done %s1227, 256
        $region84: #{tpu_custom_call.1} parent=71 // pred_fallthru
          _
      $region72: #{tpu_custom_call.1} parent=5 // pred_fallthru
        _
    $region6: #{tpu_custom_call.1} parent=1 // loop_footer
      %s29 = sadd.s32 1, %s25
    $region7: #{tpu_custom_call.1} parent=1 // loop_footer_branch
      %24 = sbr.rel target = $region3
    $region8: #{tpu_custom_call.1} parent=1 // loop_exit
      _
    %1232 = vsyncpa [#allocation3], 1
    %s1233 = scalar_lea.sflag [#allocation3], 1
    %1234 = vsyncpa %s1233, 1
    %1235 = vsyncpa [#allocation6], 1
    %1236 = vsyncpa [#allocation4], 1
    %s1237 = scalar_lea.sflag [#allocation4], 1
    %1238 = vsyncpa %s1237, 1
    %1239 = vsyncpa [#allocation10], 1
    %s1240 = scalar_lea.sflag [#allocation10], 1
    %1241 = vsyncpa %s1240, 1

</llo_original>
